<compile_context>
chip_gen: v7x
topology: tpu7x:2x2x1
jax: 0.10.0
libtpu: 0.0.40
codegen_flags: <defaults>
</compile_context>

<pallas_src>
import functools
import math

import jax
import jax.numpy as jnp
from jax.experimental import pallas as pl
from jax.experimental.pallas import tpu as pltpu


# ----------------------------- small helpers ---------------------------------------

def _nbytes(shape, dtype):
    return int(math.prod(shape)) * jnp.dtype(dtype).itemsize


def _choose_block(dim, max_block):
    """Largest tile <= max_block that divides `dim` and is a multiple of 8."""
    if dim <= max_block:
        return dim
    b = max_block - (max_block % 8)
    while b >= 8:
        if dim % b == 0:
            return b
        b -= 8
    return dim


def _vmem_capacity_bytes(default=64 << 20):
    """Physical VMEM per core; conservative fallback if the query is unavailable."""
    try:
        info = pltpu.get_tpu_info()
        for name in ("vmem_capacity_bytes", "vmem_size_bytes", "vmem_bytes"):
            val = getattr(info, name, None)
            if val:
                return int(val)
    except Exception:
        pass
    return default


def _vmem_limit(working_set_bytes):
    # Never request the full physical VMEM (leave >=16 MiB compiler headroom on v7x);
    # allow >64 MiB on v5e/v6e (128 MiB physical) when the working set needs it.
    cap = max(_vmem_capacity_bytes() - (16 << 20), 32 << 20)
    return int(min(max(working_set_bytes + (4 << 20), 32 << 20), cap))


def _layernorm(x, gamma, beta, eps=1e-12):
    # BertLayerNorm: biased variance over last dim, eps=1e-12, f32.
    # rsqrt goes to the EUP slot (no full-width VPU divide pass).
    u = jnp.mean(x, axis=-1, keepdims=True)
    xc = x - u
    s = jnp.mean(xc * xc, axis=-1, keepdims=True)
    return gamma * (xc * jax.lax.rsqrt(s + eps)) + beta


# ----------------------------------- kernels ----------------------------------------

def _projection_kernel(num_heads, head_size,
                       x_ref, src_ref, w_hid_ref, b_hid_ref, wk2_ref, bk2_ref,
                       qq2_ref, kk2_ref, v_ref):
    """Fused projections for one [TS, H] sequence tile of one batch element.

    Outputs (bf16, per-head interleaved so the attention kernel sees contiguous 2d slabs):
      qq2: [TS, 2H], head h at cols [2hd, 2hd+2d) = [scale*Q_h | scale*Q2_h]
      kk2: [TS, 2H], head h at cols [2hd, 2hd+2d) = [K_h | K2_h]
      v  : [TS, H]
    """
    nh, d = num_heads, head_size
    H = nh * d
    cdt = w_hid_ref.dtype

    x = x_ref[0]                                    # [TS, H] bf16
    src = src_ref[0]                                # [TS, H] bf16

    # One [TS,H] x [H,4H] GEMM; Q/Q2 columns carry the folded 1/sqrt(d) scale and are
    # pre-interleaved per head by the wrapper, so no extra work is needed here.
    proj = jnp.dot(x, w_hid_ref[...], preferred_element_type=jnp.float32) + b_hid_ref[...]
    k2 = jnp.dot(src, wk2_ref[...], preferred_element_type=jnp.float32) + bk2_ref[...]

    qq2_ref[0] = proj[:, :2 * H].astype(cdt)        # single lane-dense store
    v_ref[0] = proj[:, 3 * H:].astype(cdt)          # single lane-dense store

    # Interleave K (from hidden) with K2 (from source) per head ONCE at projection time,
    # so every per-head score slice in the attention kernel is one contiguous slab.
    k = proj[:, 2 * H:3 * H]
    pieces = []
    for h in range(nh):
        pieces.append(k[:, h * d:(h + 1) * d])
        pieces.append(k2[:, h * d:(h + 1) * d])
    kk2_ref[0] = jnp.concatenate(pieces, axis=-1).astype(cdt)   # one lane-dense store


def _attention_kernel(num_heads, head_size,
                      qq2_ref, kk2_ref, v_ref, mask_ref, x_ref,
                      wo_ref, bo_ref, lng_ref, lnb_ref,
                      out_ref):
    nh, d = num_heads, head_size
    tq = qq2_ref.shape[1]
    S = kk2_ref.shape[1]
    cdt = wo_ref.dtype

    qq2 = qq2_ref[0]                                # [TQ, 2H] (scale & bias folded)
    kk2 = kk2_ref[0]                                # [S, 2H]
    v = v_ref[0]                                    # [S, H]

    # Hoisted additive-mask broadcast: materialized once, reused by every head.
    mask_b = jnp.broadcast_to(mask_ref[0, 0], (tq, S)).astype(jnp.float32)

    dot = functools.partial(jax.lax.dot_general, preferred_element_type=jnp.float32)

    ctx_parts = []
    for h in range(nh):
        sl2 = slice(2 * h * d, 2 * (h + 1) * d)     # aligned [Q_h|Q2_h] / [K_h|K2_h] slab
        sl = slice(h * d, (h + 1) * d)
        # Fused self + source-attends-subthread scores: ONE dot, contraction depth 2d.
        scores = dot(qq2[:, sl2], kk2[:, sl2], (((1,), (1,)), ((), ()))) + mask_b
        m = jnp.max(scores, axis=-1, keepdims=True)
        e = jnp.exp(scores - m)
        probs = e * pl.reciprocal(jnp.sum(e, axis=-1, keepdims=True), approx=True)
        ctx_parts.append(dot(probs.astype(cdt), v[:, sl], (((1,), (0,)), ((), ()))))

    # One lane-dense [TQ, H] context (no per-head masked column stores), then a single
    # full-contraction-depth output GEMM.
    ctx = jnp.concatenate(ctx_parts, axis=-1).astype(cdt)
    attn = jnp.dot(ctx, wo_ref[...], preferred_element_type=jnp.float32) + bo_ref[...]
    resid = x_ref[0].astype(jnp.float32)
    out_ref[0] = _layernorm(attn + resid, lng_ref[...], lnb_ref[...]).astype(out_ref.dtype)


# ----------------------------------- wrapper ----------------------------------------

def my_bert_attention(params, hidden_states, attention_mask, source_embedding, num_heads,
                      *, compute_dtype=jnp.bfloat16, max_block_q=256, max_block_s=512):
    B, S, H = hidden_states.shape
    assert H % num_heads == 0
    d = H // num_heads
    scale = 1.0 / math.sqrt(d)
    cdt = compute_dtype
    f32 = jnp.float32

    # ---- wrapper-side weight fusion (free at run time) ----
    def interleave_heads(a, b):
        lead = a.shape[0]
        return jnp.stack([a.reshape(lead, num_heads, d),
                          b.reshape(lead, num_heads, d)], axis=2).reshape(lead, 2 * H)

    # 1/sqrt(d) folded into Q / Q2 weights & biases; columns interleaved per head.
    wqq2 = interleave_heads(params["wq"] * scale, params["wq2"] * scale)
    bqq2 = interleave_heads(params["bq"] * scale, params["bq2"] * scale)
    w_hid = jnp.concatenate([wqq2, params["wk"], params["wv"]], axis=1).astype(cdt)  # [H,4H]
    b_hid = jnp.concatenate([bqq2, params["bk"], params["bv"]], axis=1).astype(f32)  # [1,4H]
    wk2 = params["wk2"].astype(cdt)
    bk2 = params["bk2"].astype(f32)
    wo = params["wo"].astype(cdt)
    bo = params["bo"].astype(f32)
    ln_g = params["ln_g"].astype(f32)
    ln_b = params["ln_b"].astype(f32)

    # bf16 activations for the projection GEMMs (halves projection DMA / VMEM footprint);
    # the residual path keeps the original-dtype hidden_states.
    x_c = hidden_states.astype(cdt)
    src_c = source_embedding.astype(cdt)

    # Constant operands: whole array resident, identical block for every grid step.
    # (They are DMA'd once; pipeline_mode=pl.Buffered(1) would additionally drop the
    # second pipeline buffer — left at the default for portability.)
    def const_spec(arr):
        return pl.BlockSpec(arr.shape, lambda i, j, n=arr.ndim: (0,) * n)

    # ========== kernel 1: projections, grid=(B, seq-tiles), fully parallel ==========
    block_s = _choose_block(S, max_block_s)
    ns = S // block_s
    proj_weights = [w_hid, b_hid, wk2, bk2]

    proj_ws = (2 * (2 * _nbytes((1, block_s, H), cdt))                       # x, src (2 bufs)
               + 2 * (2 * _nbytes((1, block_s, 2 * H), cdt)
                      + _nbytes((1, block_s, H), cdt))                       # outputs (2 bufs)
               + 2 * sum(_nbytes(w.shape, w.dtype) for w in proj_weights)    # weights (2 bufs)
               + _nbytes((block_s, 4 * H), f32)                              # f32 proj temp
               + 2 * _nbytes((block_s, 2 * H), f32))                         # k2/kk2 temps

    proj_cost = pl.CostEstimate(
        flops=int(2 * B * S * H * (4 * H) + 2 * B * S * H * H),
        transcendentals=0,
        bytes_accessed=int(2 * _nbytes((B, S, H), cdt)
                           + 2 * _nbytes((B, S, 2 * H), cdt) + _nbytes((B, S, H), cdt)
                           + sum(_nbytes(w.shape, w.dtype) for w in proj_weights)))

    qq2, kk2, v = pl.pallas_call(
        functools.partial(_projection_kernel, num_heads, d),
        out_shape=(jax.ShapeDtypeStruct((B, S, 2 * H), cdt),
                   jax.ShapeDtypeStruct((B, S, 2 * H), cdt),
                   jax.ShapeDtypeStruct((B, S, H), cdt)),
        grid=(B, ns),
        in_specs=[pl.BlockSpec((1, block_s, H), lambda b, s: (b, s, 0)),
                  pl.BlockSpec((1, block_s, H), lambda b, s: (b, s, 0))]
                 + [const_spec(w) for w in proj_weights],
        out_specs=(pl.BlockSpec((1, block_s, 2 * H), lambda b, s: (b, s, 0)),
                   pl.BlockSpec((1, block_s, 2 * H), lambda b, s: (b, s, 0)),
                   pl.BlockSpec((1, block_s, H), lambda b, s: (b, s, 0))),
        compiler_params=pltpu.CompilerParams(
            dimension_semantics=("parallel", "parallel"),
            vmem_limit_bytes=_vmem_limit(proj_ws)),
        cost_estimate=proj_cost,
    )(x_c, src_c, *proj_weights)

    # ========== kernel 2: attention + output, grid=(B, query-tiles), fully parallel ===
    block_q = _choose_block(S, max_block_q)
    nq = S // block_q
    attn_weights = [wo, bo, ln_g, ln_b]

    attn_ws = (2 * (_nbytes((1, block_q, 2 * H), cdt)
                    + _nbytes((1, S, 2 * H), cdt)
                    + _nbytes((1, S, H), cdt)
                    + _nbytes((1, 1, 1, S), attention_mask.dtype)
                    + _nbytes((1, block_q, H), hidden_states.dtype)
                    + _nbytes((1, block_q, H), hidden_states.dtype))          # out block
               + 2 * sum(_nbytes(w.shape, w.dtype) for w in attn_weights)
               + 3 * _nbytes((block_q, S), f32)                               # scores/e/probs
               + 4 * _nbytes((block_q, H), f32))                              # ctx/attn/resid

    attn_cost = pl.CostEstimate(
        flops=int(B * (6 * S * S * H + 2 * S * H * H)),
        transcendentals=int(B * num_heads * S * S),
        bytes_accessed=int(2 * _nbytes((B, S, 2 * H), cdt) + _nbytes((B, S, H), cdt)
                           + _nbytes((B, 1, 1, S), attention_mask.dtype)
                           + 2 * _nbytes((B, S, H), hidden_states.dtype)
                           + sum(_nbytes(w.shape, w.dtype) for w in attn_weights)))

    return pl.pallas_call(
        functools.partial(_attention_kernel, num_heads, d),
        out_shape=jax.ShapeDtypeStruct((B, S, H), hidden_states.dtype),
        grid=(B, nq),
        in_specs=[pl.BlockSpec((1, block_q, 2 * H), lambda b, q: (b, q, 0)),   # qq2 block
                  pl.BlockSpec((1, S, 2 * H), lambda b, q: (b, 0, 0)),         # kk2 (full seq)
                  pl.BlockSpec((1, S, H), lambda b, q: (b, 0, 0)),             # v (full seq)
                  pl.BlockSpec((1, 1, 1, S), lambda b, q: (b, 0, 0, 0)),       # additive mask
                  pl.BlockSpec((1, block_q, H), lambda b, q: (b, q, 0))]       # residual
                 + [const_spec(w) for w in attn_weights],
        out_specs=pl.BlockSpec((1, block_q, H), lambda b, q: (b, q, 0)),
        compiler_params=pltpu.CompilerParams(
            dimension_semantics=("parallel", "parallel"),
            vmem_limit_bytes=_vmem_limit(attn_ws)),
        cost_estimate=attn_cost,
    )(qq2, kk2, v, attention_mask, hidden_states, *attn_weights)


# ----------------------------- deterministic params / reference ----------------------

def init_params(key, hidden_size):
    ks = iter(jax.random.split(key, 16))

    def linear(fan_in, fan_out):
        w = jax.random.normal(next(ks), (fan_in, fan_out), jnp.float32) * 0.02
        b = jax.random.normal(next(ks), (1, fan_out), jnp.float32) * 0.02
        return w, b

    p = {}
    # MyBertSelfAttention
    p["wq"], p["bq"] = linear(hidden_size, hidden_size)
    p["wk"], p["bk"] = linear(hidden_size, hidden_size)
    p["wv"], p["bv"] = linear(hidden_size, hidden_size)
    # SourceAttendsSubthread query/key (its value projection is unused in forward).
    p["wq2"], p["bq2"] = linear(hidden_size, hidden_size)
    p["wk2"], p["bk2"] = linear(hidden_size, hidden_size)
    # BertSelfOutput
    p["wo"], p["bo"] = linear(hidden_size, hidden_size)
    p["ln_g"] = jnp.ones((1, hidden_size), jnp.float32)
    p["ln_b"] = jnp.zeros((1, hidden_size), jnp.float32)
    return p


def _reference(params, hidden, mask, source, num_heads):
    """Pure-JAX f32 port of the PyTorch forward (for a tolerance check)."""
    B, S, H = hidden.shape
    d = H // num_heads

    def split(t):  # [B,S,H] -> [B,nh,S,d]
        return t.reshape(B, S, num_heads, d).transpose(0, 2, 1, 3)

    q = split(hidden @ params["wq"] + params["bq"])
    k = split(hidden @ params["wk"] + params["bk"])
    v = split(hidden @ params["wv"] + params["bv"])
    q2 = split(hidden @ params["wq2"] + params["bq2"])
    k2 = split(source @ params["wk2"] + params["bk2"])
    scores = (q @ k.transpose(0, 1, 3, 2)) / math.sqrt(d)
    scores = scores + (q2 @ k2.transpose(0, 1, 3, 2)) / math.sqrt(d)
    scores = scores + mask
    probs = jax.nn.softmax(scores, axis=-1)
    ctx = (probs @ v).transpose(0, 2, 1, 3).reshape(B, S, H)
    attn = ctx @ params["wo"] + params["bo"]
    x = attn + hidden
    u = x.mean(-1, keepdims=True)
    s = ((x - u) ** 2).mean(-1, keepdims=True)
    return params["ln_g"] * (x - u) / jnp.sqrt(s + 1e-12) + params["ln_b"]


# --------------------------------------- main ----------------------------------------

if __name__ == "__main__":
    # Small but representative config: head_size = 64 (real BERT head size).
    B, S, H, NH = 2, 16, 128, 2

    key = jax.random.PRNGKey(0)
    k_par, k_x, k_src = jax.random.split(key, 3)

    params = init_params(k_par, H)
    hidden_states = jax.random.normal(k_x, (B, S, H), jnp.float32)
    source_embedding = jax.random.normal(k_src, (B, S, H), jnp.float32)

    # Standard BERT extended attention mask: 0 for attended positions, -10000 for masked.
    keep = jnp.ones((B, S), jnp.float32).at[1, -3:].set(0.0)
    attention_mask = ((1.0 - keep) * -10000.0).reshape(B, 1, 1, S)

    out = my_bert_attention(params, hidden_states, attention_mask,
                            source_embedding, num_heads=NH)
    jax.block_until_ready(out)
    assert out.shape == (B, S, H)
    assert bool(jnp.all(jnp.isfinite(out)))

    # bf16 weights/activations + approx reciprocal -> loose tolerance vs f32 reference.
    ref = _reference(params, hidden_states, attention_mask, source_embedding, NH)
    assert bool(jnp.allclose(out, ref, rtol=0.05, atol=0.1)), \
        float(jnp.max(jnp.abs(out - ref)))

    # TODO(synk): SourceAttendsSubthread.value and the dropout layers exist in __init__ but
    # are unused / identity in this forward, so they are intentionally not materialized.
    print("KERNEL_OK")
</pallas_src>

<mosaic_0001>
module attributes {stable_mosaic.version = 11 : i64} {
  func.func @_projection_kernel(%arg0: i32, %arg1: i32, %arg2: memref<1x16x128xbf16, #tpu.memory_space<vmem>>, %arg3: memref<1x16x128xbf16, #tpu.memory_space<vmem>>, %arg4: memref<128x512xbf16, #tpu.memory_space<vmem>>, %arg5: memref<1x512xf32, #tpu.memory_space<vmem>>, %arg6: memref<128x128xbf16, #tpu.memory_space<vmem>>, %arg7: memref<1x128xf32, #tpu.memory_space<vmem>>, %arg8: memref<1x16x256xbf16, #tpu.memory_space<vmem>>, %arg9: memref<1x16x256xbf16, #tpu.memory_space<vmem>>, %arg10: memref<1x16x128xbf16, #tpu.memory_space<vmem>>) attributes {dimension_semantics = [#tpu.dimension_semantics<parallel>, #tpu.dimension_semantics<parallel>], iteration_bounds = array<i64: 2, 1>, scalar_prefetch = 0 : i64, scratch_operands = 0 : i64, tpu.core_type = #tpu.core_type<tc>, window_params = [{transform_indices = @transform_0, window_bounds = array<i64: 1, 16, 128>}, {transform_indices = @transform_1, window_bounds = array<i64: 1, 16, 128>}, {pipeline_mode = #tpu.pipeline_mode<synchronous>, transform_indices = @transform_2, window_bounds = array<i64: 128, 512>}, {pipeline_mode = #tpu.pipeline_mode<synchronous>, transform_indices = @transform_3, window_bounds = array<i64: 1, 512>}, {pipeline_mode = #tpu.pipeline_mode<synchronous>, transform_indices = @transform_4, window_bounds = array<i64: 128, 128>}, {pipeline_mode = #tpu.pipeline_mode<synchronous>, transform_indices = @transform_5, window_bounds = array<i64: 1, 128>}, {transform_indices = @transform_6, window_bounds = array<i64: 1, 16, 256>}, {transform_indices = @transform_7, window_bounds = array<i64: 1, 16, 256>}, {transform_indices = @transform_8, window_bounds = array<i64: 1, 16, 128>}]} {
    %c0 = arith.constant 0 : index
    %c0_0 = arith.constant 0 : index
    %c0_1 = arith.constant 0 : index
    %0 = vector.load %arg2[%c0, %c0_0, %c0_1] : memref<1x16x128xbf16, #tpu.memory_space<vmem>>, vector<1x16x128xbf16>
    %1 = vector.shape_cast %0 : vector<1x16x128xbf16> to vector<16x128xbf16>
    %c0_2 = arith.constant 0 : index
    %c0_3 = arith.constant 0 : index
    %c0_4 = arith.constant 0 : index
    %2 = vector.load %arg3[%c0_2, %c0_3, %c0_4] : memref<1x16x128xbf16, #tpu.memory_space<vmem>>, vector<1x16x128xbf16>
    %3 = vector.shape_cast %2 : vector<1x16x128xbf16> to vector<16x128xbf16>
    %c0_5 = arith.constant 0 : index
    %c0_6 = arith.constant 0 : index
    %4 = vector.load %arg4[%c0_5, %c0_6] : memref<128x512xbf16, #tpu.memory_space<vmem>>, vector<128x512xbf16>
    %cst = arith.constant dense<0.000000e+00> : vector<16x512xf32>
    %5 = tpu.matmul %1, %4, %cst {dimension_numbers = #tpu.dot_dimension_numbers<[1], [0], [0], [1], [0, 0, 1, 1], [], []>} : vector<16x128xbf16>, vector<128x512xbf16>, vector<16x512xf32> -> vector<16x512xf32>
    %c0_7 = arith.constant 0 : index
    %c0_8 = arith.constant 0 : index
    %6 = vector.load %arg5[%c0_7, %c0_8] : memref<1x512xf32, #tpu.memory_space<vmem>>, vector<1x512xf32>
    %7 = vector.broadcast %6 : vector<1x512xf32> to vector<16x512xf32>
    %8 = arith.addf %5, %7 : vector<16x512xf32>
    %c0_9 = arith.constant 0 : index
    %c0_10 = arith.constant 0 : index
    %9 = vector.load %arg6[%c0_9, %c0_10] : memref<128x128xbf16, #tpu.memory_space<vmem>>, vector<128x128xbf16>
    %cst_11 = arith.constant dense<0.000000e+00> : vector<16x128xf32>
    %10 = tpu.matmul %3, %9, %cst_11 {dimension_numbers = #tpu.dot_dimension_numbers<[1], [0], [0], [1], [0, 0, 1, 1], [], []>} : vector<16x128xbf16>, vector<128x128xbf16>, vector<16x128xf32> -> vector<16x128xf32>
    %c0_12 = arith.constant 0 : index
    %c0_13 = arith.constant 0 : index
    %11 = vector.load %arg7[%c0_12, %c0_13] : memref<1x128xf32, #tpu.memory_space<vmem>>, vector<1x128xf32>
    %12 = vector.broadcast %11 : vector<1x128xf32> to vector<16x128xf32>
    %13 = arith.addf %10, %12 : vector<16x128xf32>
    %14 = vector.extract_strided_slice %8 {offsets = [0, 0], sizes = [16, 256], strides = [1, 1]} : vector<16x512xf32> to vector<16x256xf32>
    %15 = arith.truncf %14 : vector<16x256xf32> to vector<16x256xbf16>
    %c0_14 = arith.constant 0 : index
    %c0_15 = arith.constant 0 : index
    %c0_16 = arith.constant 0 : index
    %16 = vector.load %arg8[%c0_14, %c0_15, %c0_16] : memref<1x16x256xbf16, #tpu.memory_space<vmem>>, vector<1x16x256xbf16>
    %17 = vector.shape_cast %16 : vector<1x16x256xbf16> to vector<16x256xbf16>
    %18 = vector.shape_cast %15 : vector<16x256xbf16> to vector<1x16x256xbf16>
    tpu.vector_store %arg8[%c0_14, %c0_15, %c0_16], %18 {strides = array<i32>} : memref<1x16x256xbf16, #tpu.memory_space<vmem>>, vector<1x16x256xbf16>,
    %19 = vector.extract_strided_slice %8 {offsets = [0, 384], sizes = [16, 128], strides = [1, 1]} : vector<16x512xf32> to vector<16x128xf32>
    %20 = arith.truncf %19 : vector<16x128xf32> to vector<16x128xbf16>
    %c0_17 = arith.constant 0 : index
    %c0_18 = arith.constant 0 : index
    %c0_19 = arith.constant 0 : index
    %21 = vector.load %arg10[%c0_17, %c0_18, %c0_19] : memref<1x16x128xbf16, #tpu.memory_space<vmem>>, vector<1x16x128xbf16>
    %22 = vector.shape_cast %21 : vector<1x16x128xbf16> to vector<16x128xbf16>
    %23 = vector.shape_cast %20 : vector<16x128xbf16> to vector<1x16x128xbf16>
    tpu.vector_store %arg10[%c0_17, %c0_18, %c0_19], %23 {strides = array<i32>} : memref<1x16x128xbf16, #tpu.memory_space<vmem>>, vector<1x16x128xbf16>,
    %24 = vector.extract_strided_slice %8 {offsets = [0, 256], sizes = [16, 128], strides = [1, 1]} : vector<16x512xf32> to vector<16x128xf32>
    %25 = vector.extract_strided_slice %24 {offsets = [0, 0], sizes = [16, 64], strides = [1, 1]} : vector<16x128xf32> to vector<16x64xf32>
    %26 = vector.extract_strided_slice %13 {offsets = [0, 0], sizes = [16, 64], strides = [1, 1]} : vector<16x128xf32> to vector<16x64xf32>
    %27 = vector.extract_strided_slice %24 {offsets = [0, 64], sizes = [16, 64], strides = [1, 1]} : vector<16x128xf32> to vector<16x64xf32>
    %28 = vector.extract_strided_slice %13 {offsets = [0, 64], sizes = [16, 64], strides = [1, 1]} : vector<16x128xf32> to vector<16x64xf32>
    %29 = tpu.concatenate %25, %26, %27, %28 in 1 : vector<16x64xf32>, vector<16x64xf32>, vector<16x64xf32>, vector<16x64xf32> -> vector<16x256xf32>
    %30 = arith.truncf %29 : vector<16x256xf32> to vector<16x256xbf16>
    %c0_20 = arith.constant 0 : index
    %c0_21 = arith.constant 0 : index
    %c0_22 = arith.constant 0 : index
    %31 = vector.load %arg9[%c0_20, %c0_21, %c0_22] : memref<1x16x256xbf16, #tpu.memory_space<vmem>>, vector<1x16x256xbf16>
    %32 = vector.shape_cast %31 : vector<1x16x256xbf16> to vector<16x256xbf16>
    %33 = vector.shape_cast %30 : vector<16x256xbf16> to vector<1x16x256xbf16>
    tpu.vector_store %arg9[%c0_20, %c0_21, %c0_22], %33 {strides = array<i32>} : memref<1x16x256xbf16, #tpu.memory_space<vmem>>, vector<1x16x256xbf16>,
    return
  }
  func.func @transform_0(%arg0: i32, %arg1: i32) -> (i32, i32, i32) {
    %c0_i32 = arith.constant 0 : i32
    %c0_i32_0 = arith.constant 0 : i32
    return %arg0, %arg1, %c0_i32 : i32, i32, i32
  }
  func.func @transform_1(%arg0: i32, %arg1: i32) -> (i32, i32, i32) {
    %c0_i32 = arith.constant 0 : i32
    %c0_i32_0 = arith.constant 0 : i32
    return %arg0, %arg1, %c0_i32 : i32, i32, i32
  }
  func.func @transform_2(%arg0: i32, %arg1: i32) -> (i32, i32) {
    %c0_i32 = arith.constant 0 : i32
    %c0_i32_0 = arith.constant 0 : i32
    %c0_i32_1 = arith.constant 0 : i32
    return %c0_i32, %c0_i32_0 : i32, i32
  }
  func.func @transform_3(%arg0: i32, %arg1: i32) -> (i32, i32) {
    %c0_i32 = arith.constant 0 : i32
    %c0_i32_0 = arith.constant 0 : i32
    %c0_i32_1 = arith.constant 0 : i32
    return %c0_i32, %c0_i32_0 : i32, i32
  }
  func.func @transform_4(%arg0: i32, %arg1: i32) -> (i32, i32) {
    %c0_i32 = arith.constant 0 : i32
    %c0_i32_0 = arith.constant 0 : i32
    %c0_i32_1 = arith.constant 0 : i32
    return %c0_i32, %c0_i32_0 : i32, i32
  }
  func.func @transform_5(%arg0: i32, %arg1: i32) -> (i32, i32) {
    %c0_i32 = arith.constant 0 : i32
    %c0_i32_0 = arith.constant 0 : i32
    %c0_i32_1 = arith.constant 0 : i32
    return %c0_i32, %c0_i32_0 : i32, i32
  }
  func.func @transform_6(%arg0: i32, %arg1: i32) -> (i32, i32, i32) {
    %c0_i32 = arith.constant 0 : i32
    %c0_i32_0 = arith.constant 0 : i32
    return %arg0, %arg1, %c0_i32 : i32, i32, i32
  }
  func.func @transform_7(%arg0: i32, %arg1: i32) -> (i32, i32, i32) {
    %c0_i32 = arith.constant 0 : i32
    %c0_i32_0 = arith.constant 0 : i32
    return %arg0, %arg1, %c0_i32 : i32, i32, i32
  }
  func.func @transform_8(%arg0: i32, %arg1: i32) -> (i32, i32, i32) {
    %c0_i32 = arith.constant 0 : i32
    %c0_i32_0 = arith.constant 0 : i32
    return %arg0, %arg1, %c0_i32 : i32, i32, i32
  }
}

</mosaic_0001>

<llo_original>
// kernel: tpu_custom_call.1
$region0: #{tpu_custom_call.1}
  #allocation0 [shape = 'u32[]', space=smem, size = 0x4, offset = 0x4, fixed_abs, tag = 'smem constant byte address 0x4 - core index']
  #allocation1 [shape = 'u32[144,128]{1,0:T(1,128)}', space=vmem, size = 0x12000, scoped, tag = 'internal scratch']
  %s0 = inlined_call_operand.hbm [shape: bf16[2,16,128], index: 0, kind: input, shape index: {}]
  %s1 = inlined_call_operand.hbm [shape: bf16[2,16,128], index: 1, kind: input, shape index: {}]
  %s2 = inlined_call_operand.hbm [shape: bf16[128,512], index: 2, kind: input, shape index: {}]
  %s3 = inlined_call_operand.vmem [shape: f32[1,512], index: 3, kind: input, shape index: {}]
  %s4 = inlined_call_operand.hbm [shape: bf16[128,128], index: 4, kind: input, shape index: {}]
  %s5 = inlined_call_operand.vmem [shape: f32[1,128], index: 5, kind: input, shape index: {}]
  %s6 = inlined_call_operand.hbm [shape: bf16[2,16,256], index: 6, kind: output, shape index: {0}]
  %s7 = inlined_call_operand.hbm [shape: bf16[2,16,256], index: 7, kind: output, shape index: {1}]
  %s8 = inlined_call_operand.hbm [shape: bf16[2,16,128], index: 8, kind: output, shape index: {2}]
  %9 = xla_tuple %s6, %s7, %s8
  %s10 = sld [smem:[#allocation0]]
  $region89: #{tpu_custom_call.1} parent=0
    _
  %s12 = ssub.s32 1, %s10
  %s13 = scalar_select 0, %s12, %s10
  $region1: #{tpu_custom_call.1} parent=0
    #allocation2 [shape = 'u8[8192]{0}', space=vmem, size = 0x2000, scoped, tag = 'input window, operand 0']
    #allocation3 [shape = 's32[2]{0}', space=sflag, size = 0x8, scoped, tag = 'scoped memory for tpu_custom_call.1']
    #allocation4 [shape = 's32[2]{0}', space=sflag, size = 0x8, scoped, tag = 'scoped memory for tpu_custom_call.1']
    #allocation5 [shape = 'u8[8192]{0}', space=vmem, size = 0x2000, scoped, tag = 'input window, operand 1']
    #allocation6 [shape = 's32[2]{0}', space=sflag, size = 0x8, scoped, tag = 'scoped memory for tpu_custom_call.1']
    #allocation7 [shape = 'u8[131072]{0}', space=vmem, size = 0x20000, scoped, tag = 'input window, operand 2, single buffered']
    #allocation8 [shape = 'u8[32768]{0}', space=vmem, size = 0x8000, scoped, tag = 'input window, operand 4, single buffered']
    #allocation9 [shape = 's32[1]{0}', space=sflag, size = 0x4, scoped, tag = 'scoped memory for tpu_custom_call.1']
    #allocation10 [shape = 'u8[16384]{0}', space=vmem, size = 0x4000, scoped, tag = 'output window, operand 0']
    #allocation11 [shape = 'u8[16384]{0}', space=vmem, size = 0x4000, scoped, tag = 'output window, operand 1']
    #allocation12 [shape = 's32[2]{0}', space=sflag, size = 0x8, scoped, tag = 'scoped memory for tpu_custom_call.1']
    #allocation13 [shape = 'u8[8192]{0}', space=vmem, size = 0x2000, scoped, tag = 'output window, operand 2']
    %14 = vsyncpa [#allocation3], 0
    %s15 = scalar_lea.sflag [#allocation3], 1
    %16 = vsyncpa %s15, 0
    %17 = vsyncpa [#allocation6], 0
    %s18 = scalar_lea.sflag [#allocation6], 1
    %19 = vsyncpa %s18, 0
    %20 = vsyncpa [#allocation9], 0
    %21 = vsyncpa [#allocation4], 0
    %s22 = scalar_lea.sflag [#allocation4], 1
    %23 = vsyncpa %s22, 0
    %24 = vsyncpa [#allocation12], 0
    %s25 = scalar_lea.sflag [#allocation12], 1
    %26 = vsyncpa %s25, 0
    loop: start=0, step=1, limit=4
    $region2: #{tpu_custom_call.1} parent=1 // loop_pre_header
      _
    $region3: #{tpu_custom_call.1} parent=1 // loop_header
      %s28 = sphi 0, %s32
      %p29 = scmp.ge.s32.totalorder %s28, 4
      %s35 = sphi 0, %s47
      %s36 = sphi 0, %s43
      %s37 = sphi 0, %s35
      %s38 = sphi 0, %s36
      %s39 = sphi 0, %s37
      %s40 = sphi 0, %s38
      %s52 = sphi 0, %s54
      %s55 = sphi 0, %s52
      %s56 = sphi 0, %s55
      %s72 = sphi 0, %s56
      %s80 = sphi 0, %s82
      %s83 = sphi 0, %s80
      %s84 = sphi 0, %s83
      %s100 = sphi 0, %s84
      %s104 = sphi 0, %s104
      %s106 = sphi 0, %s104
      %s107 = sphi 0, %s106
      %s121 = sphi 0, %s107
      %s125 = sphi 0, %s125
      %s127 = sphi 0, %s125
      %s128 = sphi 0, %s127
      %s142 = sphi 0, %s128
      %s146 = sphi 0, %s146
      %s148 = sphi 0, %s146
      %s149 = sphi 0, %s148
      %s163 = sphi 0, %s149
      %s167 = sphi 0, %s167
      %s169 = sphi 0, %s167
      %s170 = sphi 0, %s169
      %s184 = sphi 0, %s170
      %s192 = sphi 0, %s194
      %s195 = sphi 0, %s192
      %s196 = sphi 0, %s195
      %s212 = sphi 0, %s196
      %s220 = sphi 0, %s222
      %s223 = sphi 0, %s220
      %s224 = sphi 0, %s223
      %s240 = sphi 0, %s224
      %s248 = sphi 0, %s250
      %s251 = sphi 0, %s248
      %s252 = sphi 0, %s251
      %s268 = sphi 0, %s252
    $region4: #{tpu_custom_call.1} parent=1 // loop_header_branch
      %31 = sbr.rel (%p29) target = $region8
    $region5: #{tpu_custom_call.1} parent=1 // loop_body
      %s33 = ssub.s32 %s28, 1
      %s34 = ssub.s32 %s28, 2
      %s41 = sadd.s32 1, %s36
      %p42 = scmp.ge.s32.totalorder %s41, 1
      %s43 = scalar_select %p42, 0, %s41
      %s44 = sadd.s32 1, %s35
      %s45 = scalar_select %p42, %s44, %s35
      %p46 = scmp.ge.s32.totalorder %s45, 2
      %s47 = scalar_select %p46, 0, %s45
      %s48 = ssub.s32 %s35, %s47
      %s49 = ssub.s32 %s36, %s43
      %s50 = sor.u32 %s48, %s49
      %p51 = scmp.eq.s32.totalorder %s50, 0
      %s53 = sadd.s32 %s52, 1
      %s54 = scalar_select %p51, %s52, %s53
      %p57 = pneg %p51
      %p58 = scmp.eq.s32.totalorder %s28, 1
      %p59 = por %p57, %p58
      %p60 = scmp.ne.s32.totalorder %s52, %s55
      %p61 = scmp.eq.s32.totalorder %s28, 0
      %p62 = por %p60, %p61
      %p63 = scmp.ne.s32.totalorder %s52, %s55
      %p64 = scmp.eq.s32.totalorder %s33, 1
      %p65 = por %p63, %p64
      %p66 = scmp.ne.s32.totalorder %s55, %s56
      %p67 = scmp.eq.s32.totalorder %s33, 0
      %p68 = por %p66, %p67
      %p69 = scmp.ne.s32.totalorder %s55, %s56
      %p70 = scmp.eq.s32.totalorder %s34, 1
      %p71 = por %p69, %p70
      %p73 = scmp.ne.s32.totalorder %s56, %s72
      %p74 = scmp.eq.s32.totalorder %s34, 0
      %p75 = por %p73, %p74
      %s76 = ssub.s32 %s35, %s47
      %s77 = ssub.s32 %s36, %s43
      %s78 = sor.u32 %s76, %s77
      %p79 = scmp.eq.s32.totalorder %s78, 0
      %s81 = sadd.s32 %s80, 1
      %s82 = scalar_select %p79, %s80, %s81
      %p85 = pneg %p79
      %p86 = scmp.eq.s32.totalorder %s28, 1
      %p87 = por %p85, %p86
      %p88 = scmp.ne.s32.totalorder %s80, %s83
      %p89 = scmp.eq.s32.totalorder %s28, 0
      %p90 = por %p88, %p89
      %p91 = scmp.ne.s32.totalorder %s80, %s83
      %p92 = scmp.eq.s32.totalorder %s33, 1
      %p93 = por %p91, %p92
      %p94 = scmp.ne.s32.totalorder %s83, %s84
      %p95 = scmp.eq.s32.totalorder %s33, 0
      %p96 = por %p94, %p95
      %p97 = scmp.ne.s32.totalorder %s83, %s84
      %p98 = scmp.eq.s32.totalorder %s34, 1
      %p99 = por %p97, %p98
      %p101 = scmp.ne.s32.totalorder %s84, %s100
      %p102 = scmp.eq.s32.totalorder %s34, 0
      %p103 = por %p101, %p102
      %s105 = sadd.s32 %s104, 1
      %p108 = scmp.eq.s32.totalorder %s28, 1
      %p109 = scmp.ne.s32.totalorder %s104, %s106
      %p110 = scmp.eq.s32.totalorder %s28, 0
      %p111 = por %p109, %p110
      %p112 = scmp.ne.s32.totalorder %s104, %s106
      %p113 = scmp.eq.s32.totalorder %s33, 1
      %p114 = por %p112, %p113
      %p115 = scmp.ne.s32.totalorder %s106, %s107
      %p116 = scmp.eq.s32.totalorder %s33, 0
      %p117 = por %p115, %p116
      %p118 = scmp.ne.s32.totalorder %s106, %s107
      %p119 = scmp.eq.s32.totalorder %s34, 1
      %p120 = por %p118, %p119
      %p122 = scmp.ne.s32.totalorder %s107, %s121
      %p123 = scmp.eq.s32.totalorder %s34, 0
      %p124 = por %p122, %p123
      %s126 = sadd.s32 %s125, 1
      %p129 = scmp.eq.s32.totalorder %s28, 1
      %p130 = scmp.ne.s32.totalorder %s125, %s127
      %p131 = scmp.eq.s32.totalorder %s28, 0
      %p132 = por %p130, %p131
      %p133 = scmp.ne.s32.totalorder %s125, %s127
      %p134 = scmp.eq.s32.totalorder %s33, 1
      %p135 = por %p133, %p134
      %p136 = scmp.ne.s32.totalorder %s127, %s128
      %p137 = scmp.eq.s32.totalorder %s33, 0
      %p138 = por %p136, %p137
      %p139 = scmp.ne.s32.totalorder %s127, %s128
      %p140 = scmp.eq.s32.totalorder %s34, 1
      %p141 = por %p139, %p140
      %p143 = scmp.ne.s32.totalorder %s128, %s142
      %p144 = scmp.eq.s32.totalorder %s34, 0
      %p145 = por %p143, %p144
      %s147 = sadd.s32 %s146, 1
      %p150 = scmp.eq.s32.totalorder %s28, 1
      %p151 = scmp.ne.s32.totalorder %s146, %s148
      %p152 = scmp.eq.s32.totalorder %s28, 0
      %p153 = por %p151, %p152
      %p154 = scmp.ne.s32.totalorder %s146, %s148
      %p155 = scmp.eq.s32.totalorder %s33, 1
      %p156 = por %p154, %p155
      %p157 = scmp.ne.s32.totalorder %s148, %s149
      %p158 = scmp.eq.s32.totalorder %s33, 0
      %p159 = por %p157, %p158
      %p160 = scmp.ne.s32.totalorder %s148, %s149
      %p161 = scmp.eq.s32.totalorder %s34, 1
      %p162 = por %p160, %p161
      %p164 = scmp.ne.s32.totalorder %s149, %s163
      %p165 = scmp.eq.s32.totalorder %s34, 0
      %p166 = por %p164, %p165
      %s168 = sadd.s32 %s167, 1
      %p171 = scmp.eq.s32.totalorder %s28, 1
      %p172 = scmp.ne.s32.totalorder %s167, %s169
      %p173 = scmp.eq.s32.totalorder %s28, 0
      %p174 = por %p172, %p173
      %p175 = scmp.ne.s32.totalorder %s167, %s169
      %p176 = scmp.eq.s32.totalorder %s33, 1
      %p177 = por %p175, %p176
      %p178 = scmp.ne.s32.totalorder %s169, %s170
      %p179 = scmp.eq.s32.totalorder %s33, 0
      %p180 = por %p178, %p179
      %p181 = scmp.ne.s32.totalorder %s169, %s170
      %p182 = scmp.eq.s32.totalorder %s34, 1
      %p183 = por %p181, %p182
      %p185 = scmp.ne.s32.totalorder %s170, %s184
      %p186 = scmp.eq.s32.totalorder %s34, 0
      %p187 = por %p185, %p186
      %s188 = ssub.s32 %s35, %s47
      %s189 = ssub.s32 %s36, %s43
      %s190 = sor.u32 %s188, %s189
      %p191 = scmp.eq.s32.totalorder %s190, 0
      %s193 = sadd.s32 %s192, 1
      %s194 = scalar_select %p191, %s192, %s193
      %p197 = pneg %p191
      %p198 = scmp.eq.s32.totalorder %s28, 1
      %p199 = por %p197, %p198
      %p200 = scmp.ne.s32.totalorder %s192, %s195
      %p201 = scmp.eq.s32.totalorder %s28, 0
      %p202 = por %p200, %p201
      %p203 = scmp.ne.s32.totalorder %s192, %s195
      %p204 = scmp.eq.s32.totalorder %s33, 1
      %p205 = por %p203, %p204
      %p206 = scmp.ne.s32.totalorder %s195, %s196
      %p207 = scmp.eq.s32.totalorder %s33, 0
      %p208 = por %p206, %p207
      %p209 = scmp.ne.s32.totalorder %s195, %s196
      %p210 = scmp.eq.s32.totalorder %s34, 1
      %p211 = por %p209, %p210
      %p213 = scmp.ne.s32.totalorder %s196, %s212
      %p214 = scmp.eq.s32.totalorder %s34, 0
      %p215 = por %p213, %p214
      %s216 = ssub.s32 %s35, %s47
      %s217 = ssub.s32 %s36, %s43
      %s218 = sor.u32 %s216, %s217
      %p219 = scmp.eq.s32.totalorder %s218, 0
      %s221 = sadd.s32 %s220, 1
      %s222 = scalar_select %p219, %s220, %s221
      %p225 = pneg %p219
      %p226 = scmp.eq.s32.totalorder %s28, 1
      %p227 = por %p225, %p226
      %p228 = scmp.ne.s32.totalorder %s220, %s223
      %p229 = scmp.eq.s32.totalorder %s28, 0
      %p230 = por %p228, %p229
      %p231 = scmp.ne.s32.totalorder %s220, %s223
      %p232 = scmp.eq.s32.totalorder %s33, 1
      %p233 = por %p231, %p232
      %p234 = scmp.ne.s32.totalorder %s223, %s224
      %p235 = scmp.eq.s32.totalorder %s33, 0
      %p236 = por %p234, %p235
      %p237 = scmp.ne.s32.totalorder %s223, %s224
      %p238 = scmp.eq.s32.totalorder %s34, 1
      %p239 = por %p237, %p238
      %p241 = scmp.ne.s32.totalorder %s224, %s240
      %p242 = scmp.eq.s32.totalorder %s34, 0
      %p243 = por %p241, %p242
      %s244 = ssub.s32 %s35, %s47
      %s245 = ssub.s32 %s36, %s43
      %s246 = sor.u32 %s244, %s245
      %p247 = scmp.eq.s32.totalorder %s246, 0
      %s249 = sadd.s32 %s248, 1
      %s250 = scalar_select %p247, %s248, %s249
      %p253 = pneg %p247
      %p254 = scmp.eq.s32.totalorder %s28, 1
      %p255 = por %p253, %p254
      %p256 = scmp.ne.s32.totalorder %s248, %s251
      %p257 = scmp.eq.s32.totalorder %s28, 0
      %p258 = por %p256, %p257
      %p259 = scmp.ne.s32.totalorder %s248, %s251
      %p260 = scmp.eq.s32.totalorder %s33, 1
      %p261 = por %p259, %p260
      %p262 = scmp.ne.s32.totalorder %s251, %s252
      %p263 = scmp.eq.s32.totalorder %s33, 0
      %p264 = por %p262, %p263
      %p265 = scmp.ne.s32.totalorder %s251, %s252
      %p266 = scmp.eq.s32.totalorder %s34, 1
      %p267 = por %p265, %p266
      %p269 = scmp.ne.s32.totalorder %s252, %s268
      %p270 = scmp.eq.s32.totalorder %s34, 0
      %p271 = por %p269, %p270
      %p272 = scmp.le.s32.totalorder 1, %s28
      %p273 = scmp.lt.s32.totalorder %s28, 3
      %p274 = pnand %p272, %p273
      %p275 = pneg %p274
      // Predicated region
      $region9: #{tpu_custom_call.1} parent=5 // pred_check
        _
      $region10: #{tpu_custom_call.1} parent=5 // pred_check_branch
        %277 = sbr.rel (%p274) target = $region12
      $region11: #{tpu_custom_call.1} parent=5 // pred_region
        %s278 = ssub.s32 %s28, 1
        // Predicated region
        $region13: #{tpu_custom_call.1} parent=11 // pred_check
          %p279 = pneg %p117
        $region14: #{tpu_custom_call.1} parent=11 // pred_check_branch
          %281 = sbr.rel (%p279) target = $region16
        $region15: #{tpu_custom_call.1} parent=11 // pred_region
          %s283 = ssub.s32 4096, 4096
          %284 = vsyncadd [#allocation6], %s283
          %s285 = sshll.u32 [#allocation7], 4
          %s286 = int_to_ptr.vmem [resolvable:$true] %s285
          %291 = dma.hbm_to_vmem [thread:$0]  %s2, 4096, %s286, [#allocation6], 256, 256, 16
        $region16: #{tpu_custom_call.1} parent=11 // pred_fallthru
          _
        // Predicated region
        $region17: #{tpu_custom_call.1} parent=11 // pred_check
          %p292 = pneg %p138
        $region18: #{tpu_custom_call.1} parent=11 // pred_check_branch
          %294 = sbr.rel (%p292) target = $region20
        $region19: #{tpu_custom_call.1} parent=11 // pred_region
          _
        $region20: #{tpu_custom_call.1} parent=11 // pred_fallthru
          _
        // Predicated region
        $region21: #{tpu_custom_call.1} parent=11 // pred_check
          %p295 = pneg %p159
        $region22: #{tpu_custom_call.1} parent=11 // pred_check_branch
          %297 = sbr.rel (%p295) target = $region24
        $region23: #{tpu_custom_call.1} parent=11 // pred_region
          %s299 = ssub.s32 1024, 1024
          %300 = vsyncadd [#allocation9], %s299
          %s301 = sshll.u32 [#allocation8], 4
          %s302 = int_to_ptr.vmem [resolvable:$true] %s301
          %307 = dma.hbm_to_vmem [thread:$0]  %s4, 1024, %s302, [#allocation9], 64, 64, 4
        $region24: #{tpu_custom_call.1} parent=11 // pred_fallthru
          _
        // Predicated region
        $region25: #{tpu_custom_call.1} parent=11 // pred_check
          %p308 = pneg %p180
        $region26: #{tpu_custom_call.1} parent=11 // pred_check_branch
          %310 = sbr.rel (%p308) target = $region28
        $region27: #{tpu_custom_call.1} parent=11 // pred_region
          _
        $region28: #{tpu_custom_call.1} parent=11 // pred_fallthru
          _
      $region12: #{tpu_custom_call.1} parent=5 // pred_fallthru
        _
      %p311 = scmp.lt.s32.totalorder %s28, 2
      // Predicated region
      $region29: #{tpu_custom_call.1} parent=5 // pred_check
        %p312 = pneg %p311
      $region30: #{tpu_custom_call.1} parent=5 // pred_check_branch
        %314 = sbr.rel (%p312) target = $region32
      $region31: #{tpu_custom_call.1} parent=5 // pred_region
        // Predicated region
        $region33: #{tpu_custom_call.1} parent=31 // pred_check
          %p315 = pneg %p62
        $region34: #{tpu_custom_call.1} parent=31 // pred_check_branch
          %317 = sbr.rel (%p315) target = $region36
        $region35: #{tpu_custom_call.1} parent=31 // pred_region
          %s318 = sand.u32 %s52, 1
          %s319 = scalar_lea.sflag [#allocation3], %s318
          %s320 = sand.u32 %s52, 1
          %s321 = smul.addr %s320, 8
          %s322 = scalar_lea.vmem [#allocation2], %s321
          %s323 = smul.u32 2, %s36
          %s325 = ssub.s32 128, 128
          %326 = vsyncadd %s319, %s325
          %s327 = smul.addr %s35, 2
          %s328 = sadd.s32 %s323, %s327
          %s329 = smul.addr %s328, 64
          %s330 = scalar_lea.hbm %s0, %s329
          %s331 = sshll.u32 %s322, 4
          %s332 = int_to_ptr.vmem [resolvable:$true] %s331
          %337 = dma.hbm_to_vmem [thread:$0]  %s330, 128, %s332, %s319, 64, 64, 4
        $region36: #{tpu_custom_call.1} parent=31 // pred_fallthru
          _
        // Predicated region
        $region37: #{tpu_custom_call.1} parent=31 // pred_check
          %p338 = pneg %p90
        $region38: #{tpu_custom_call.1} parent=31 // pred_check_branch
          %340 = sbr.rel (%p338) target = $region40
        $region39: #{tpu_custom_call.1} parent=31 // pred_region
          %s341 = sand.u32 %s28, 1
          %s342 = scalar_lea.sflag [#allocation6], %s341
          %s343 = sand.u32 %s80, 1
          %s344 = smul.addr %s343, 8
          %s345 = scalar_lea.vmem [#allocation5], %s344
          %s346 = smul.u32 2, %s36
          %s348 = ssub.s32 128, 128
          %349 = vsyncadd %s342, %s348
          %s350 = smul.addr %s35, 2
          %s351 = sadd.s32 %s346, %s350
          %s352 = smul.addr %s351, 64
          %s353 = scalar_lea.hbm %s1, %s352
          %s354 = sshll.u32 %s345, 4
          %s355 = int_to_ptr.vmem [resolvable:$true] %s354
          %360 = dma.hbm_to_vmem [thread:$0]  %s353, 128, %s355, %s342, 64, 64, 4
        $region40: #{tpu_custom_call.1} parent=31 // pred_fallthru
          _
      $region32: #{tpu_custom_call.1} parent=5 // pred_fallthru
        _
      %p361 = scmp.le.s32.totalorder 1, %s28
      %p362 = scmp.lt.s32.totalorder %s28, 3
      %p363 = pnand %p361, %p362
      %p364 = pneg %p363
      // Predicated region
      $region41: #{tpu_custom_call.1} parent=5 // pred_check
        _
      $region42: #{tpu_custom_call.1} parent=5 // pred_check_branch
        %366 = sbr.rel (%p363) target = $region44
      $region43: #{tpu_custom_call.1} parent=5 // pred_region
        %s367 = ssub.s32 %s28, 1
        %s368 = sand.u32 %s55, 1
        %s369 = scalar_lea.sflag [#allocation3], %s368
        %s370 = sand.u32 %s55, 1
        %s371 = smul.addr %s370, 8
        %s372 = scalar_lea.vmem [#allocation2], %s371
        // Predicated region
        $region45: #{tpu_custom_call.1} parent=43 // pred_check
          %p373 = pneg %p68
        $region46: #{tpu_custom_call.1} parent=43 // pred_check_branch
          %375 = sbr.rel (%p373) target = $region48
        $region47: #{tpu_custom_call.1} parent=43 // pred_region
          %376 = dma.done %s369, 128
        $region48: #{tpu_custom_call.1} parent=43 // pred_fallthru
          _
        %s377 = sand.u32 %s33, 1
        %s378 = scalar_lea.sflag [#allocation6], %s377
        %s379 = sand.u32 %s83, 1
        %s380 = smul.addr %s379, 8
        %s381 = scalar_lea.vmem [#allocation5], %s380
        // Predicated region
        $region49: #{tpu_custom_call.1} parent=43 // pred_check
          %p382 = pneg %p96
        $region50: #{tpu_custom_call.1} parent=43 // pred_check_branch
          %384 = sbr.rel (%p382) target = $region52
        $region51: #{tpu_custom_call.1} parent=43 // pred_region
          %385 = dma.done %s378, 128
        $region52: #{tpu_custom_call.1} parent=43 // pred_fallthru
          _
        // Predicated region
        $region53: #{tpu_custom_call.1} parent=43 // pred_check
          %p386 = pneg %p117
        $region54: #{tpu_custom_call.1} parent=43 // pred_check_branch
          %388 = sbr.rel (%p386) target = $region56
        $region55: #{tpu_custom_call.1} parent=43 // pred_region
          %389 = dma.done [#allocation6], 4096
        $region56: #{tpu_custom_call.1} parent=43 // pred_fallthru
          _
        // Predicated region
        $region57: #{tpu_custom_call.1} parent=43 // pred_check
          %p390 = pneg %p159
        $region58: #{tpu_custom_call.1} parent=43 // pred_check_branch
          %392 = sbr.rel (%p390) target = $region60
        $region59: #{tpu_custom_call.1} parent=43 // pred_region
          %393 = dma.done [#allocation9], 1024
        $region60: #{tpu_custom_call.1} parent=43 // pred_fallthru
          _
        %s394 = sand.u32 %s55, 1
        %s395 = scalar_lea.sflag [#allocation3], %s394
        %s396 = sand.u32 %s55, 1
        %s397 = smul.addr %s396, 8
        %s398 = scalar_lea.vmem [#allocation2], %s397
        %p399 = pneg %p68
        %p400 = pneg %p65
        %s401 = sand.u32 %s33, 1
        %s402 = scalar_lea.sflag [#allocation6], %s401
        %s403 = sand.u32 %s83, 1
        %s404 = smul.addr %s403, 8
        %s405 = scalar_lea.vmem [#allocation5], %s404
        %p406 = pneg %p96
        %p407 = pneg %p93
        %p408 = pneg %p117
        %p409 = pneg %p114
        %p410 = pneg %p138
        %p411 = pneg %p135
        %p412 = pneg %p159
        %p413 = pneg %p156
        %p414 = pneg %p180
        %p415 = pneg %p177
        %p416 = pneg %p208
        %p417 = pneg %p205
        %s418 = sand.u32 %s195, 1
        %s419 = scalar_lea.sflag [#allocation4], %s418
        %s420 = sand.u32 %s195, 1
        %s421 = smul.addr %s420, 16
        %s422 = scalar_lea.vmem [#allocation10], %s421
        %p423 = pneg %p236
        %p424 = pneg %p233
        %s425 = sand.u32 %s33, 1
        %s426 = scalar_lea.sflag [#allocation12], %s425
        %s427 = sand.u32 %s223, 1
        %s428 = smul.addr %s427, 16
        %s429 = scalar_lea.vmem [#allocation11], %s428
        %p430 = pneg %p264
        %p431 = pneg %p261
        %s432 = sand.u32 %s33, 1
        %s433 = scalar_lea.sflag [#allocation12], %s432
        %s434 = sand.u32 %s251, 1
        %s435 = smul.addr %s434, 8
        %s436 = scalar_lea.vmem [#allocation13], %s435
        %s437 = smul.u32 2, %s38
        %s438 = smul.u32 2, %s38
        %s439 = smul.u32 2, %s38
        %s440 = smul.u32 2, %s38
        %s441 = smul.u32 2, %s38
        %v443 = vld [vmem:[%s372] sm:$0xf]
        %v444 = vld [vmem:[%s372 + $0x4] sm:$0xf]
        %v445 = vld [vmem:[%s381] sm:$0xf]
        %v446 = vld [vmem:[%s381 + $0x4] sm:$0xf]
        %v447 = vld [vmem:[#allocation7] sm:$0xff]
        %v448 = vld [vmem:[#allocation7 + $0x8] sm:$0xff]
        %v449 = vld [vmem:[#allocation7 + $0x10] sm:$0xff]
        %v450 = vld [vmem:[#allocation7 + $0x18] sm:$0xff]
        %v451 = vld [vmem:[#allocation7 + $0x20] sm:$0xff]
        %v452 = vld [vmem:[#allocation7 + $0x28] sm:$0xff]
        %v453 = vld [vmem:[#allocation7 + $0x30] sm:$0xff]
        %v454 = vld [vmem:[#allocation7 + $0x38] sm:$0xff]
        %v455 = vld [vmem:[#allocation7 + $0x40] sm:$0xff]
        %v456 = vld [vmem:[#allocation7 + $0x48] sm:$0xff]
        %v457 = vld [vmem:[#allocation7 + $0x50] sm:$0xff]
        %v458 = vld [vmem:[#allocation7 + $0x58] sm:$0xff]
        %v459 = vld [vmem:[#allocation7 + $0x60] sm:$0xff]
        %v460 = vld [vmem:[#allocation7 + $0x68] sm:$0xff]
        %v461 = vld [vmem:[#allocation7 + $0x70] sm:$0xff]
        %v462 = vld [vmem:[#allocation7 + $0x78] sm:$0xff]
        %v463 = vld [vmem:[#allocation7 + $0x80] sm:$0xff]
        %v464 = vld [vmem:[#allocation7 + $0x88] sm:$0xff]
        %v465 = vld [vmem:[#allocation7 + $0x90] sm:$0xff]
        %v466 = vld [vmem:[#allocation7 + $0x98] sm:$0xff]
        %v467 = vld [vmem:[#allocation7 + $0xa0] sm:$0xff]
        %v468 = vld [vmem:[#allocation7 + $0xa8] sm:$0xff]
        %v469 = vld [vmem:[#allocation7 + $0xb0] sm:$0xff]
        %v470 = vld [vmem:[#allocation7 + $0xb8] sm:$0xff]
        %v471 = vld [vmem:[#allocation7 + $0xc0] sm:$0xff]
        %v472 = vld [vmem:[#allocation7 + $0xc8] sm:$0xff]
        %v473 = vld [vmem:[#allocation7 + $0xd0] sm:$0xff]
        %v474 = vld [vmem:[#allocation7 + $0xd8] sm:$0xff]
        %v475 = vld [vmem:[#allocation7 + $0xe0] sm:$0xff]
        %v476 = vld [vmem:[#allocation7 + $0xe8] sm:$0xff]
        %v477 = vld [vmem:[#allocation7 + $0xf0] sm:$0xff]
        %v478 = vld [vmem:[#allocation7 + $0xf8] sm:$0xff]
        %v479 = vld [vmem:[%s3] sm:$0xf]
        %v481 = vlaneseq
        %v482 = vshrl.u32 %v481, 7
        %v483 = vsub.s32 0, %v482
        %v484 = vrot.slane %v479, %v483
        %v485 = vlaneseq
        %v486 = vshrl.u32 %v485, 7
        %v487 = vsub.s32 1, %v486
        %v488 = vrot.slane %v479, %v487
        %v489 = vlaneseq
        %v490 = vshrl.u32 %v489, 7
        %v491 = vsub.s32 2, %v490
        %v492 = vrot.slane %v479, %v491
        %v493 = vlaneseq
        %v494 = vshrl.u32 %v493, 7
        %v495 = vsub.s32 3, %v494
        %v496 = vrot.slane %v479, %v495
        %v503 = vunpack.c.l.b16 %v443
        %v504 = vunpack.c.l.b16 %v444
        %v505 = vpack.c.b16 %v504, %v503
        %v539 = vunpack.c.l.b16 %v447
        %v540 = vunpack.c.h.b16 %v447
        %v541 = vunpack.c.l.b16 %v448
        %v542 = vunpack.c.h.b16 %v448
        %v543 = vunpack.c.l.b16 %v449
        %v544 = vunpack.c.h.b16 %v449
        %v545 = vunpack.c.l.b16 %v450
        %v546 = vunpack.c.h.b16 %v450
        %v547 = vunpack.c.l.b16 %v451
        %v548 = vunpack.c.h.b16 %v451
        %v549 = vunpack.c.l.b16 %v452
        %v550 = vunpack.c.h.b16 %v452
        %v551 = vunpack.c.l.b16 %v453
        %v552 = vunpack.c.h.b16 %v453
        %v553 = vunpack.c.l.b16 %v454
        %v554 = vunpack.c.h.b16 %v454
        %v555 = vunpack.c.l.b16 %v455
        %v556 = vunpack.c.h.b16 %v455
        %v557 = vunpack.c.l.b16 %v456
        %v558 = vunpack.c.h.b16 %v456
        %v559 = vunpack.c.l.b16 %v457
        %v560 = vunpack.c.h.b16 %v457
        %v561 = vunpack.c.l.b16 %v458
        %v562 = vunpack.c.h.b16 %v458
        %v563 = vunpack.c.l.b16 %v459
        %v564 = vunpack.c.h.b16 %v459
        %v565 = vunpack.c.l.b16 %v460
        %v566 = vunpack.c.h.b16 %v460
        %v567 = vunpack.c.l.b16 %v461
        %v568 = vunpack.c.h.b16 %v461
        %v569 = vunpack.c.l.b16 %v462
        %v570 = vunpack.c.h.b16 %v462
        %v571 = vunpack.c.l.b16 %v463
        %v572 = vunpack.c.h.b16 %v463
        %v573 = vunpack.c.l.b16 %v464
        %v574 = vunpack.c.h.b16 %v464
        %v575 = vunpack.c.l.b16 %v465
        %v576 = vunpack.c.h.b16 %v465
        %v577 = vunpack.c.l.b16 %v466
        %v578 = vunpack.c.h.b16 %v466
        %v579 = vunpack.c.l.b16 %v467
        %v580 = vunpack.c.h.b16 %v467
        %v581 = vunpack.c.l.b16 %v468
        %v582 = vunpack.c.h.b16 %v468
        %v583 = vunpack.c.l.b16 %v469
        %v584 = vunpack.c.h.b16 %v469
        %v585 = vunpack.c.l.b16 %v470
        %v586 = vunpack.c.h.b16 %v470
        %v587 = vunpack.c.l.b16 %v471
        %v588 = vunpack.c.h.b16 %v471
        %v589 = vunpack.c.l.b16 %v472
        %v590 = vunpack.c.h.b16 %v472
        %v591 = vunpack.c.l.b16 %v473
        %v592 = vunpack.c.h.b16 %v473
        %v593 = vunpack.c.l.b16 %v474
        %v594 = vunpack.c.h.b16 %v474
        %v595 = vunpack.c.l.b16 %v475
        %v596 = vunpack.c.h.b16 %v475
        %v597 = vunpack.c.l.b16 %v476
        %v598 = vunpack.c.h.b16 %v476
        %v599 = vunpack.c.l.b16 %v477
        %v600 = vunpack.c.h.b16 %v477
        %v601 = vunpack.c.l.b16 %v478
        %v602 = vunpack.c.h.b16 %v478
        %v603 = vpack.c.b16 %v543, %v539
        %v604 = vpack.c.b16 %v544, %v540
        %v605 = vpack.c.b16 %v545, %v541
        %v606 = vpack.c.b16 %v546, %v542
        %v607 = vpack.c.b16 %v551, %v547
        %v608 = vpack.c.b16 %v552, %v548
        %v609 = vpack.c.b16 %v553, %v549
        %v610 = vpack.c.b16 %v554, %v550
        %v611 = vpack.c.b16 %v559, %v555
        %v612 = vpack.c.b16 %v560, %v556
        %v613 = vpack.c.b16 %v561, %v557
        %v614 = vpack.c.b16 %v562, %v558
        %v615 = vpack.c.b16 %v567, %v563
        %v616 = vpack.c.b16 %v568, %v564
        %v617 = vpack.c.b16 %v569, %v565
        %v618 = vpack.c.b16 %v570, %v566
        %v619 = vpack.c.b16 %v575, %v571
        %v620 = vpack.c.b16 %v576, %v572
        %v621 = vpack.c.b16 %v577, %v573
        %v622 = vpack.c.b16 %v578, %v574
        %v623 = vpack.c.b16 %v583, %v579
        %v624 = vpack.c.b16 %v584, %v580
        %v625 = vpack.c.b16 %v585, %v581
        %v626 = vpack.c.b16 %v586, %v582
        %v627 = vpack.c.b16 %v591, %v587
        %v628 = vpack.c.b16 %v592, %v588
        %v629 = vpack.c.b16 %v593, %v589
        %v630 = vpack.c.b16 %v594, %v590
        %v631 = vpack.c.b16 %v599, %v595
        %v632 = vpack.c.b16 %v600, %v596
        %v633 = vpack.c.b16 %v601, %v597
        %v634 = vpack.c.b16 %v602, %v598
        %667 = vmatprep.subr.bf16.mxu0 %v604
        %668 = vmatpush1.bf16.msra.mxu0 %v603
        %669 = vmatprep.subr.bf16.mxu0 %v608
        %670 = vmatpush1.bf16.msra.mxu0 %v607
        %671 = vmatprep.subr.bf16.mxu0 %v612
        %672 = vmatpush1.bf16.msra.mxu0 %v611
        %673 = vmatprep.subr.bf16.mxu0 %v616
        %674 = vmatpush1.bf16.msra.mxu0 %v615
        %675 = vmatprep.subr.bf16.mxu0 %v620
        %676 = vmatpush1.bf16.msra.mxu0 %v619
        %677 = vmatprep.subr.bf16.mxu0 %v624
        %678 = vmatpush1.bf16.msra.mxu0 %v623
        %679 = vmatprep.subr.bf16.mxu0 %v628
        %680 = vmatpush1.bf16.msra.mxu0 %v627
        %681 = vmatprep.subr.bf16.mxu0 %v632
        %682 = vmatpush1.bf16.msra.mxu0 %v631
        %683 = vmatprep.subr.bf16.mxu0 0
        %684 = vmatpush1.bf16.msra.mxu0 0
        %685 = vmatprep.subr.bf16.mxu0 0
        %686 = vmatpush1.bf16.msra.mxu0 0
        %687 = vmatprep.subr.bf16.mxu0 0
        %688 = vmatpush1.bf16.msra.mxu0 0
        %689 = vmatprep.subr.bf16.mxu0 0
        %690 = vmatpush1.bf16.msra.mxu0 0
        %691 = vmatprep.subr.bf16.mxu0 0
        %692 = vmatpush1.bf16.msra.mxu0 0
        %693 = vmatprep.subr.bf16.mxu0 0
        %694 = vmatpush1.bf16.msra.mxu0 0
        %695 = vmatprep.subr.bf16.mxu0 0
        %696 = vmatpush1.bf16.msra.mxu0 0
        %697 = vmatprep.subr.bf16.mxu0 0
        %698 = vmatpush1.bf16.msra.mxu0 0
        %699 = vmatprep.mubr.bf16.mxu0 0
        %700 = vmatmul.mubr.bf16.gmra.mrb[0].mxu0 %v505
        %v701 = vpop.f32.mrb[0].mxu0
        %v702 = vadd.f32 %v484, %v701
        %v703 = vpop.f32.mrb[0].mxu0
        %v704 = vadd.f32 %v488, %v703
        %v705 = vpop.f32.mrb[0].mxu0
        %v706 = vadd.f32 %v484, %v705
        %v707 = vpop.f32.mrb[0].mxu0
        %v708 = vadd.f32 %v488, %v707
        %709 = vdwg.mxu0
        %710 = vmatprep.subr.bf16.mxu0 %v606
        %711 = vmatpush1.bf16.msra.mxu0 %v605
        %712 = vmatprep.subr.bf16.mxu0 %v610
        %713 = vmatpush1.bf16.msra.mxu0 %v609
        %714 = vmatprep.subr.bf16.mxu0 %v614
        %715 = vmatpush1.bf16.msra.mxu0 %v613
        %716 = vmatprep.subr.bf16.mxu0 %v618
        %717 = vmatpush1.bf16.msra.mxu0 %v617
        %718 = vmatprep.subr.bf16.mxu0 %v622
        %719 = vmatpush1.bf16.msra.mxu0 %v621
        %720 = vmatprep.subr.bf16.mxu0 %v626
        %721 = vmatpush1.bf16.msra.mxu0 %v625
        %722 = vmatprep.subr.bf16.mxu0 %v630
        %723 = vmatpush1.bf16.msra.mxu0 %v629
        %724 = vmatprep.subr.bf16.mxu0 %v634
        %725 = vmatpush1.bf16.msra.mxu0 %v633
        %726 = vmatprep.subr.bf16.mxu0 0
        %727 = vmatpush1.bf16.msra.mxu0 0
        %728 = vmatprep.subr.bf16.mxu0 0
        %729 = vmatpush1.bf16.msra.mxu0 0
        %730 = vmatprep.subr.bf16.mxu0 0
        %731 = vmatpush1.bf16.msra.mxu0 0
        %732 = vmatprep.subr.bf16.mxu0 0
        %733 = vmatpush1.bf16.msra.mxu0 0
        %734 = vmatprep.subr.bf16.mxu0 0
        %735 = vmatpush1.bf16.msra.mxu0 0
        %736 = vmatprep.subr.bf16.mxu0 0
        %737 = vmatpush1.bf16.msra.mxu0 0
        %738 = vmatprep.subr.bf16.mxu0 0
        %739 = vmatpush1.bf16.msra.mxu0 0
        %740 = vmatprep.subr.bf16.mxu0 0
        %741 = vmatpush1.bf16.msra.mxu0 0
        %742 = vmatprep.mubr.bf16.mxu0 0
        %743 = vmatmul.mubr.bf16.gmra.mrb[0].mxu0 %v505
        %v744 = vpop.f32.mrb[0].mxu0
        %v745 = vadd.f32 %v492, %v744
        %v746 = vpop.f32.mrb[0].mxu0
        %v747 = vadd.f32 %v496, %v746
        %v748 = vpop.f32.mrb[0].mxu0
        %v749 = vadd.f32 %v492, %v748
        %v750 = vpop.f32.mrb[0].mxu0
        %v751 = vadd.f32 %v496, %v750
        %752 = vdwg.mxu0
        %v753 = vld [vmem:[#allocation8] sm:$0xf]
        %v754 = vld [vmem:[#allocation8 + $0x4] sm:$0xf]
        %v755 = vld [vmem:[#allocation8 + $0x8] sm:$0xf]
        %v756 = vld [vmem:[#allocation8 + $0xc] sm:$0xf]
        %v757 = vld [vmem:[#allocation8 + $0x10] sm:$0xf]
        %v758 = vld [vmem:[#allocation8 + $0x14] sm:$0xf]
        %v759 = vld [vmem:[#allocation8 + $0x18] sm:$0xf]
        %v760 = vld [vmem:[#allocation8 + $0x1c] sm:$0xf]
        %v761 = vld [vmem:[#allocation8 + $0x20] sm:$0xf]
        %v762 = vld [vmem:[#allocation8 + $0x24] sm:$0xf]
        %v763 = vld [vmem:[#allocation8 + $0x28] sm:$0xf]
        %v764 = vld [vmem:[#allocation8 + $0x2c] sm:$0xf]
        %v765 = vld [vmem:[#allocation8 + $0x30] sm:$0xf]
        %v766 = vld [vmem:[#allocation8 + $0x34] sm:$0xf]
        %v767 = vld [vmem:[#allocation8 + $0x38] sm:$0xf]
        %v768 = vld [vmem:[#allocation8 + $0x3c] sm:$0xf]
        %v769 = vld [vmem:[%s5] sm:$0x1]
        %v771 = vlaneseq
        %v772 = vshrl.u32 %v771, 7
        %v773 = vsub.s32 0, %v772
        %v774 = vrot.slane %v769, %v773
        %v778 = vunpack.c.l.b16 %v445
        %v779 = vunpack.c.l.b16 %v446
        %v780 = vpack.c.b16 %v779, %v778
        %v798 = vunpack.c.l.b16 %v753
        %v799 = vunpack.c.l.b16 %v754
        %v800 = vunpack.c.l.b16 %v755
        %v801 = vunpack.c.l.b16 %v756
        %v802 = vunpack.c.l.b16 %v757
        %v803 = vunpack.c.l.b16 %v758
        %v804 = vunpack.c.l.b16 %v759
        %v805 = vunpack.c.l.b16 %v760
        %v806 = vunpack.c.l.b16 %v761
        %v807 = vunpack.c.l.b16 %v762
        %v808 = vunpack.c.l.b16 %v763
        %v809 = vunpack.c.l.b16 %v764
        %v810 = vunpack.c.l.b16 %v765
        %v811 = vunpack.c.l.b16 %v766
        %v812 = vunpack.c.l.b16 %v767
        %v813 = vunpack.c.l.b16 %v768
        %v814 = vpack.c.b16 %v799, %v798
        %v815 = vpack.c.b16 %v801, %v800
        %v816 = vpack.c.b16 %v803, %v802
        %v817 = vpack.c.b16 %v805, %v804
        %v818 = vpack.c.b16 %v807, %v806
        %v819 = vpack.c.b16 %v809, %v808
        %v820 = vpack.c.b16 %v811, %v810
        %v821 = vpack.c.b16 %v813, %v812
        %830 = vmatprep.subr.bf16.mxu0 0
        %831 = vmatpush1.bf16.msra.mxu0 %v814
        %832 = vmatprep.subr.bf16.mxu0 0
        %833 = vmatpush1.bf16.msra.mxu0 %v815
        %834 = vmatprep.subr.bf16.mxu0 0
        %835 = vmatpush1.bf16.msra.mxu0 %v816
        %836 = vmatprep.subr.bf16.mxu0 0
        %837 = vmatpush1.bf16.msra.mxu0 %v817
        %838 = vmatprep.subr.bf16.mxu0 0
        %839 = vmatpush1.bf16.msra.mxu0 %v818
        %840 = vmatprep.subr.bf16.mxu0 0
        %841 = vmatpush1.bf16.msra.mxu0 %v819
        %842 = vmatprep.subr.bf16.mxu0 0
        %843 = vmatpush1.bf16.msra.mxu0 %v820
        %844 = vmatprep.subr.bf16.mxu0 0
        %845 = vmatpush1.bf16.msra.mxu0 %v821
        %846 = vmatprep.subr.bf16.mxu0 0
        %847 = vmatpush1.bf16.msra.mxu0 0
        %848 = vmatprep.subr.bf16.mxu0 0
        %849 = vmatpush1.bf16.msra.mxu0 0
        %850 = vmatprep.subr.bf16.mxu0 0
        %851 = vmatpush1.bf16.msra.mxu0 0
        %852 = vmatprep.subr.bf16.mxu0 0
        %853 = vmatpush1.bf16.msra.mxu0 0
        %854 = vmatprep.subr.bf16.mxu0 0
        %855 = vmatpush1.bf16.msra.mxu0 0
        %856 = vmatprep.subr.bf16.mxu0 0
        %857 = vmatpush1.bf16.msra.mxu0 0
        %858 = vmatprep.subr.bf16.mxu0 0
        %859 = vmatpush1.bf16.msra.mxu0 0
        %860 = vmatprep.subr.bf16.mxu0 0
        %861 = vmatpush1.bf16.msra.mxu0 0
        %862 = vmatprep.mubr.bf16.mxu0 0
        %863 = vmatmul.mubr.bf16.gmra.mrb[0].mxu0 %v780
        %v864 = vpop.f32.mrb[0].mxu0
        %v865 = vadd.f32 %v774, %v864
        %v866 = vpop.f32.mrb[0].mxu0
        %v867 = vpop.f32.mrb[0].mxu0
        %v868 = vadd.f32 %v774, %v867
        %v869 = vpop.f32.mrb[0].mxu0
        %870 = vdwg.mxu0
        %v871 = vpack.c.bf16 %v706, %v702
        %v872 = vpack.c.bf16 %v708, %v704
        %v875 = vunpack.c.l.b16 %v871
        %v876 = vunpack.c.l.b16 %v872
        %v877 = vunpack.c.h.b16 %v871
        %v878 = vunpack.c.h.b16 %v872
        %v879 = vpack.c.b16 %v876, %v875
        %v880 = vpack.c.b16 %v878, %v877
        %883 = vst [vmem:[%s422] sm:$0xff] %v879
        %884 = vst [vmem:[%s422 + $0x8] sm:$0xff] %v880
        %v885 = vpack.c.bf16 %v751, %v747
        %v887 = vunpack.c.l.b16 %v885
        %v888 = vunpack.c.h.b16 %v885
        %v889 = vpack.c.b16 %v887, %v887
        %v890 = vpack.c.b16 %v888, %v888
        %893 = vst [vmem:[%s436] sm:$0xf] %v889
        %894 = vst [vmem:[%s436 + $0x4] sm:$0xf] %v890
        %897 = vrot.lane.b32.xlu0 %v865, 64
        %v898 = vpop.permute.xlu0 %897
        %899 = vrot.lane.b32.xlu0 %v868, 64
        %v900 = vpop.permute.xlu0 %899
        %905 = vrot.lane.b32.xlu0 %v745, 64
        %v906 = vpop.permute.xlu0 %905
        %907 = vrot.lane.b32.xlu0 %v749, 64
        %v908 = vpop.permute.xlu0 %907
        %vm911 = vcmask 523264
        %v912 = vsel %vm911, %v745, %v898
        %v913 = vsel %vm911, %v749, %v900
        %v914 = vsel %vm911, %v906, %v865
        %v915 = vsel %vm911, %v908, %v868
        %v916 = vpack.c.bf16 %v913, %v912
        %v917 = vpack.c.bf16 %v915, %v914
        %v920 = vunpack.c.l.b16 %v916
        %v921 = vunpack.c.l.b16 %v917
        %v922 = vunpack.c.h.b16 %v916
        %v923 = vunpack.c.h.b16 %v917
        %v924 = vpack.c.b16 %v921, %v920
        %v925 = vpack.c.b16 %v923, %v922
        %928 = vst [vmem:[%s429] sm:$0xff] %v924
        %929 = vst [vmem:[%s429 + $0x8] sm:$0xff] %v925
        %s930 = sand.u32 %s195, 1
        %s931 = scalar_lea.sflag [#allocation4], %s930
        %s932 = sand.u32 %s195, 1
        %s933 = smul.addr %s932, 16
        %s934 = scalar_lea.vmem [#allocation10], %s933
        %s935 = sand.u32 %s33, 1
        %s936 = scalar_lea.sflag [#allocation12], %s935
        %s937 = sand.u32 %s223, 1
        %s938 = smul.addr %s937, 16
        %s939 = scalar_lea.vmem [#allocation11], %s938
        %s940 = sand.u32 %s33, 1
        %s941 = scalar_lea.sflag [#allocation12], %s940
        %s942 = sand.u32 %s251, 1
        %s943 = smul.addr %s942, 8
        %s944 = scalar_lea.vmem [#allocation13], %s943
        // Predicated region
        $region61: #{tpu_custom_call.1} parent=43 // pred_check
          %p945 = pneg %p205
        $region62: #{tpu_custom_call.1} parent=43 // pred_check_branch
          %947 = sbr.rel (%p945) target = $region64
        $region63: #{tpu_custom_call.1} parent=43 // pred_region
          %s948 = smul.u32 2, %s38
          %s950 = ssub.s32 256, 256
          %951 = vsyncadd %s931, %s950
          %s952 = smul.addr %s948, 2
          %s953 = smul.addr %s37, 4
          %s954 = sadd.s32 %s952, %s953
          %s955 = smul.addr %s954, 64
          %s956 = scalar_lea.hbm %s6, %s955
          %s957 = sshll.u32 %s934, 4
          %s958 = int_to_ptr.vmem [resolvable:$true] %s957
          %963 = dma.vmem_to_hbm [thread:$0]  %s958, 256, %s956, %s931, 128, 128, 8
        $region64: #{tpu_custom_call.1} parent=43 // pred_fallthru
          _
        // Predicated region
        $region65: #{tpu_custom_call.1} parent=43 // pred_check
          %p964 = pneg %p233
        $region66: #{tpu_custom_call.1} parent=43 // pred_check_branch
          %966 = sbr.rel (%p964) target = $region68
        $region67: #{tpu_custom_call.1} parent=43 // pred_region
          %s967 = smul.u32 2, %s38
          %s969 = ssub.s32 256, 256
          %970 = vsyncadd %s936, %s969
          %s971 = smul.addr %s967, 2
          %s972 = smul.addr %s37, 4
          %s973 = sadd.s32 %s971, %s972
          %s974 = smul.addr %s973, 64
          %s975 = scalar_lea.hbm %s7, %s974
          %s976 = sshll.u32 %s939, 4
          %s977 = int_to_ptr.vmem [resolvable:$true] %s976
          %982 = dma.vmem_to_hbm [thread:$0]  %s977, 256, %s975, %s936, 128, 128, 8
        $region68: #{tpu_custom_call.1} parent=43 // pred_fallthru
          _
        // Predicated region
        $region69: #{tpu_custom_call.1} parent=43 // pred_check
          %p983 = pneg %p261
        $region70: #{tpu_custom_call.1} parent=43 // pred_check_branch
          %985 = sbr.rel (%p983) target = $region72
        $region71: #{tpu_custom_call.1} parent=43 // pred_region
          %s986 = smul.u32 2, %s38
          %s988 = ssub.s32 128, 128
          %989 = vsyncadd %s941, %s988
          %s990 = smul.addr %s37, 2
          %s991 = sadd.s32 %s986, %s990
          %s992 = smul.addr %s991, 64
          %s993 = scalar_lea.hbm %s8, %s992
          %s994 = sshll.u32 %s944, 4
          %s995 = int_to_ptr.vmem [resolvable:$true] %s994
          %1000 = dma.vmem_to_hbm [thread:$0]  %s995, 128, %s993, %s941, 64, 64, 4
        $region72: #{tpu_custom_call.1} parent=43 // pred_fallthru
          _
      $region44: #{tpu_custom_call.1} parent=5 // pred_fallthru
        _
      %p1001 = scmp.le.s32.totalorder 2, %s28
      // Predicated region
      $region73: #{tpu_custom_call.1} parent=5 // pred_check
        %p1002 = pneg %p1001
      $region74: #{tpu_custom_call.1} parent=5 // pred_check_branch
        %1004 = sbr.rel (%p1002) target = $region76
      $region75: #{tpu_custom_call.1} parent=5 // pred_region
        %s1005 = ssub.s32 %s28, 2
        // Predicated region
        $region77: #{tpu_custom_call.1} parent=75 // pred_check
          %p1006 = pneg %p211
        $region78: #{tpu_custom_call.1} parent=75 // pred_check_branch
          %1008 = sbr.rel (%p1006) target = $region80
        $region79: #{tpu_custom_call.1} parent=75 // pred_region
          %s1009 = sand.u32 %s196, 1
          %s1010 = scalar_lea.sflag [#allocation4], %s1009
          %s1011 = sand.u32 %s196, 1
          %s1012 = smul.addr %s1011, 16
          %s1013 = scalar_lea.vmem [#allocation10], %s1012
          %1014 = dma.done %s1010, 256
        $region80: #{tpu_custom_call.1} parent=75 // pred_fallthru
          _
        // Predicated region
        $region81: #{tpu_custom_call.1} parent=75 // pred_check
          %p1015 = pneg %p239
        $region82: #{tpu_custom_call.1} parent=75 // pred_check_branch
          %1017 = sbr.rel (%p1015) target = $region84
        $region83: #{tpu_custom_call.1} parent=75 // pred_region
          %s1018 = sand.u32 %s34, 1
          %s1019 = scalar_lea.sflag [#allocation12], %s1018
          %s1020 = sand.u32 %s224, 1
          %s1021 = smul.addr %s1020, 16
          %s1022 = scalar_lea.vmem [#allocation11], %s1021
          %1023 = dma.done %s1019, 256
        $region84: #{tpu_custom_call.1} parent=75 // pred_fallthru
          _
        // Predicated region
        $region85: #{tpu_custom_call.1} parent=75 // pred_check
          %p1024 = pneg %p267
        $region86: #{tpu_custom_call.1} parent=75 // pred_check_branch
          %1026 = sbr.rel (%p1024) target = $region88
        $region87: #{tpu_custom_call.1} parent=75 // pred_region
          %s1027 = sand.u32 %s34, 1
          %s1028 = scalar_lea.sflag [#allocation12], %s1027
          %s1029 = sand.u32 %s252, 1
          %s1030 = smul.addr %s1029, 8
          %s1031 = scalar_lea.vmem [#allocation13], %s1030
          %1032 = dma.done %s1028, 128
        $region88: #{tpu_custom_call.1} parent=75 // pred_fallthru
          _
      $region76: #{tpu_custom_call.1} parent=5 // pred_fallthru
        _
    $region6: #{tpu_custom_call.1} parent=1 // loop_footer
      %s32 = sadd.s32 1, %s28
    $region7: #{tpu_custom_call.1} parent=1 // loop_footer_branch
      %27 = sbr.rel target = $region3
    $region8: #{tpu_custom_call.1} parent=1 // loop_exit
      _
    %1033 = vsyncpa [#allocation3], 1
    %s1034 = scalar_lea.sflag [#allocation3], 1
    %1035 = vsyncpa %s1034, 1
    %1036 = vsyncpa [#allocation6], 1
    %s1037 = scalar_lea.sflag [#allocation6], 1
    %1038 = vsyncpa %s1037, 1
    %1039 = vsyncpa [#allocation9], 1
    %1040 = vsyncpa [#allocation4], 1
    %s1041 = scalar_lea.sflag [#allocation4], 1
    %1042 = vsyncpa %s1041, 1
    %1043 = vsyncpa [#allocation12], 1
    %s1044 = scalar_lea.sflag [#allocation12], 1
    %1045 = vsyncpa %s1044, 1

</llo_original>
